<compile_context>
chip_gen: v7x
topology: tpu7x:2x2x1
jax: 0.10.0
libtpu: 0.0.40
codegen_flags: <defaults>
</compile_context>

<pallas_src>
import functools
import math

import jax
import jax.numpy as jnp
from jax import lax
from jax.experimental import pallas as pl
from jax.experimental.pallas import tpu as pltpu


LANE = 128  # TPU vreg lane width; projection widths are padded to this.


# ----------------------------------------------------------------------------
# Kernel
# ----------------------------------------------------------------------------
def _rolling_attention_kernel(x_ref, hist_ref, wq_ref, bq_ref, wkv_ref, bkv_ref, out_ref):
    """One row-block of queries vs. the full (resident) history."""
    dp = wq_ref.shape[1]  # lane-padded projection width (multiple of 128)

    # Q projection: BN affine, linear bias and 1/sqrt(input_dim) are pre-folded
    # into wq/bq; padded lanes are exactly zero.
    q = jnp.dot(x_ref[...], wq_ref[...], preferred_element_type=jnp.float32) + bq_ref[...]

    # Fused K|V projection: K occupies lanes [0, dp), V lanes [dp, 2*dp), so
    # both slices are vreg-tile aligned (no cross-lane shuffle).
    kv = jnp.dot(hist_ref[...], wkv_ref[...], preferred_element_type=jnp.float32) + bkv_ref[...]
    k = kv[:, :dp]          # [H, dp]
    v = kv[:, dp:]          # [H, dp]

    # Attention scores [tb, H]: contract the shared (padded) feature axis
    # directly on the MXU; zero-padded lanes contribute exactly zero.
    scores = lax.dot_general(
        q, k,
        dimension_numbers=(((1,), (1,)), ((), ())),
        preferred_element_type=jnp.float32,
    )

    # Numerically-stable softmax over the history axis.
    m = jnp.max(scores, axis=-1, keepdims=True)
    p = jnp.exp(scores - m)
    denom = jnp.sum(p, axis=-1, keepdims=True)
    weights = p * pl.reciprocal(denom, approx=False)  # exact to hold 1e-5 vs reference

    # Context [tb, dp] (padded cols -> tanh(0)=0), lane-dense store.
    ctx = jnp.dot(weights, v, preferred_element_type=jnp.float32)
    out_ref[...] = jnp.tanh(ctx).astype(out_ref.dtype)


# ----------------------------------------------------------------------------
# One-time parameter folding (hoisted out of the forward path)
# ----------------------------------------------------------------------------
def fold_params(params, *, input_dim, bn_eps=1e-5, lane=LANE):
    """Fold eval-mode BatchNorm affines, linear biases and the 1/sqrt(input_dim)
    attention scale into the projection weights, zero-padded to `lane` columns.

    Call ONCE (these are eval-mode constants) and reuse the result for every
    forward call — the per-call path is then a single pallas_call.
    Returns (wq_f [2*size, dp], bq_f [1, dp], wkv_f [input_dim, 2*dp], bkv_f [1, 2*dp]).
    """
    output_dim = params["wq"].shape[0]
    dp = ((output_dim + lane - 1) // lane) * lane
    inv_sqrt_d = 1.0 / math.sqrt(float(input_dim))

    def bn_affine(gamma, beta, mean, var):
        scale = gamma / jnp.sqrt(var + bn_eps)
        return scale, beta - mean * scale

    def pad_cols(w):
        return jnp.pad(w, ((0, 0), (0, dp - w.shape[1])))

    def pad_bias(b):
        return jnp.pad(b.reshape(1, -1), ((0, 0), (0, dp - b.shape[0])))

    qs, qh = bn_affine(params["q_gamma"], params["q_beta"], params["q_mean"], params["q_var"])
    ks, kh = bn_affine(params["k_gamma"], params["k_beta"], params["k_mean"], params["k_var"])
    vs, vh = bn_affine(params["v_gamma"], params["v_beta"], params["v_mean"], params["v_var"])

    # PyTorch nn.Linear weight is [out, in]; transpose to [in, out] and fold:
    #   BN(x @ W^T + b) = x @ (W^T * scale) + (b * scale + shift)
    # For Q additionally fold the 1/sqrt(input_dim) attention scale.
    wq_f = pad_cols((params["wq"].T * qs) * inv_sqrt_d)
    bq_f = pad_bias((params["bq"] * qs + qh) * inv_sqrt_d)

    wk_f = pad_cols(params["wk"].T * ks)
    bk_f = pad_bias(params["bk"] * ks + kh)
    wv_f = pad_cols(params["wv"].T * vs)
    bv_f = pad_bias(params["bv"] * vs + vh)

    # Fused, lane-aligned K|V projection: K in lanes [0,dp), V in lanes [dp,2*dp).
    wkv_f = jnp.concatenate([wk_f, wv_f], axis=1)   # [input_dim, 2*dp]
    bkv_f = jnp.concatenate([bk_f, bv_f], axis=1)   # [1, 2*dp]
    return wq_f, bq_f, wkv_f, bkv_f


# ----------------------------------------------------------------------------
# Forward call (jitted; the only per-call work is the pallas_call itself)
# ----------------------------------------------------------------------------
@functools.partial(jax.jit, static_argnames=("output_dim", "block_rows"))
def rolling_attention3_forward(x, history, wq_f, bq_f, wkv_f, bkv_f, *,
                               output_dim, block_rows=8):
    """x: [N, 2*size] queries (stack timesteps on the row axis to amortize one
    pallas_call launch over many steps); history: [H, input_dim]."""
    n_rows, feat = x.shape
    dp = wq_f.shape[1]

    tb = min(block_rows, n_rows)
    n_pad = (-n_rows) % tb
    if n_pad:  # static under jit
        x = jnp.pad(x, ((0, n_pad), (0, 0)))
    n_padded = x.shape[0]
    grid = (n_padded // tb,)

    out = pl.pallas_call(
        _rolling_attention_kernel,
        out_shape=jax.ShapeDtypeStruct((n_padded, dp), jnp.float32),
        grid=grid,
        in_specs=[
            pl.BlockSpec((tb, feat), lambda i: (i, 0)),          # x: per-block rows
            pl.BlockSpec(history.shape, lambda i: (0, 0)),       # history: resident
            pl.BlockSpec(wq_f.shape, lambda i: (0, 0)),          # folded weights: resident
            pl.BlockSpec(bq_f.shape, lambda i: (0, 0)),
            pl.BlockSpec(wkv_f.shape, lambda i: (0, 0)),
            pl.BlockSpec(bkv_f.shape, lambda i: (0, 0)),
        ],
        out_specs=pl.BlockSpec((tb, dp), lambda i: (i, 0)),      # lane-dense output tile
        compiler_params=pltpu.CompilerParams(
            dimension_semantics=("parallel",),                   # v7x: shard across 2 TCs
        ),
    )(x, history, wq_f, bq_f, wkv_f, bkv_f)

    # Drop row padding and the zero-padded lanes (one cheap slice per batched call).
    return out[:n_rows, :output_dim]


# ----------------------------------------------------------------------------
# Synthetic params + pure-JAX reference (mirrors the PyTorch forward, eval mode)
# ----------------------------------------------------------------------------
def init_params(key, input_dim, output_dim, size):
    keys = jax.random.split(key, 12)
    return {
        # Linear layers (PyTorch layout: weight [out, in], bias [out]).
        "wq": 0.1 * jax.random.normal(keys[0], (output_dim, size * 2), jnp.float32),
        "bq": 0.1 * jax.random.normal(keys[1], (output_dim,), jnp.float32),
        "wk": 0.1 * jax.random.normal(keys[2], (output_dim, input_dim), jnp.float32),
        "bk": 0.1 * jax.random.normal(keys[3], (output_dim,), jnp.float32),
        "wv": 0.1 * jax.random.normal(keys[4], (output_dim, input_dim), jnp.float32),
        "bv": 0.1 * jax.random.normal(keys[5], (output_dim,), jnp.float32),
        # BatchNorm1d params + running stats (eval mode).
        "q_gamma": 1.0 + 0.05 * jax.random.normal(keys[6], (output_dim,), jnp.float32),
        "q_beta": 0.05 * jax.random.normal(keys[7], (output_dim,), jnp.float32),
        "q_mean": 0.05 * jax.random.normal(keys[8], (output_dim,), jnp.float32),
        "q_var": jnp.ones((output_dim,), jnp.float32),
        "k_gamma": 1.0 + 0.05 * jax.random.normal(keys[9], (output_dim,), jnp.float32),
        "k_beta": 0.05 * jax.random.normal(keys[10], (output_dim,), jnp.float32),
        "k_mean": jnp.zeros((output_dim,), jnp.float32),
        "k_var": jnp.ones((output_dim,), jnp.float32),
        "v_gamma": jnp.ones((output_dim,), jnp.float32),
        "v_beta": jnp.zeros((output_dim,), jnp.float32),
        "v_mean": jnp.zeros((output_dim,), jnp.float32),
        "v_var": 1.0 + 0.1 * jax.random.uniform(keys[11], (output_dim,), jnp.float32),
    }


def reference_forward(x, history, params, *, input_dim, bn_eps=1e-5):
    def bn(y, g, b, m, v):
        return (y - m) / jnp.sqrt(v + bn_eps) * g + b

    q = bn(x @ params["wq"].T + params["bq"],
           params["q_gamma"], params["q_beta"], params["q_mean"], params["q_var"])
    k = bn(history @ params["wk"].T + params["bk"],
           params["k_gamma"], params["k_beta"], params["k_mean"], params["k_var"])
    v = bn(history @ params["wv"].T + params["bv"],
           params["v_gamma"], params["v_beta"], params["v_mean"], params["v_var"])
    scores = (q @ k.T) / (float(input_dim) ** 0.5)
    w = jax.nn.softmax(scores, axis=-1)
    return jnp.tanh(w @ v)


if __name__ == "__main__":
    # Small, module-consistent shapes.
    input_dim = 8      # feature dim of history rows
    output_dim = 32    # attention projection dim
    size = 16          # positional embedding size -> x has 2*size features
    B = 8              # queries per timestep
    T = 4              # timesteps batched into one pallas_call (grid axis)
    H = 16             # current history length (<= max_length)

    key = jax.random.PRNGKey(0)
    k_param, k_x, k_h = jax.random.split(key, 3)

    params = init_params(k_param, input_dim, output_dim, size)
    x = jax.random.normal(k_x, (T * B, 2 * size), jnp.float32)      # stacked queries
    history = jax.random.normal(k_h, (H, input_dim), jnp.float32)   # eval_history

    # Fold BN / biases / attention scale into the weights ONCE (hoisted out of
    # the per-call path); reuse for every forward call.
    folded = tuple(jax.block_until_ready(f) for f in fold_params(params, input_dim=input_dim))

    out = rolling_attention3_forward(x, history, *folded,
                                     output_dim=output_dim, block_rows=B)
    out = jax.block_until_ready(out)

    ref = reference_forward(x, history, params, input_dim=input_dim)
    assert out.shape == (T * B, output_dim)
    assert jnp.allclose(out, ref, atol=1e-5, rtol=1e-5), "mismatch vs JAX reference"

    print("KERNEL_OK")
</pallas_src>

<mosaic_0001>
module attributes {stable_mosaic.version = 11 : i64} {
  func.func @_rolling_attention_kernel(%arg0: i32, %arg1: memref<8x32xf32, #tpu.memory_space<vmem>>, %arg2: memref<16x8xf32, #tpu.memory_space<vmem>>, %arg3: memref<32x128xf32, #tpu.memory_space<vmem>>, %arg4: memref<1x128xf32, #tpu.memory_space<vmem>>, %arg5: memref<8x256xf32, #tpu.memory_space<vmem>>, %arg6: memref<1x256xf32, #tpu.memory_space<vmem>>, %arg7: memref<8x128xf32, #tpu.memory_space<vmem>>) attributes {dimension_semantics = [#tpu.dimension_semantics<parallel>], iteration_bounds = array<i64: 4>, scalar_prefetch = 0 : i64, scratch_operands = 0 : i64, tpu.core_type = #tpu.core_type<tc>, window_params = [{transform_indices = @transform_0, window_bounds = array<i64: 8, 32>}, {pipeline_mode = #tpu.pipeline_mode<synchronous>, transform_indices = @transform_1, window_bounds = array<i64: 16, 8>}, {pipeline_mode = #tpu.pipeline_mode<synchronous>, transform_indices = @transform_2, window_bounds = array<i64: 32, 128>}, {pipeline_mode = #tpu.pipeline_mode<synchronous>, transform_indices = @transform_3, window_bounds = array<i64: 1, 128>}, {pipeline_mode = #tpu.pipeline_mode<synchronous>, transform_indices = @transform_4, window_bounds = array<i64: 8, 256>}, {pipeline_mode = #tpu.pipeline_mode<synchronous>, transform_indices = @transform_5, window_bounds = array<i64: 1, 256>}, {transform_indices = @transform_6, window_bounds = array<i64: 8, 128>}]} {
    %c0 = arith.constant 0 : index
    %c0_0 = arith.constant 0 : index
    %0 = vector.load %arg1[%c0, %c0_0] : memref<8x32xf32, #tpu.memory_space<vmem>>, vector<8x32xf32>
    %c0_1 = arith.constant 0 : index
    %c0_2 = arith.constant 0 : index
    %1 = vector.load %arg3[%c0_1, %c0_2] : memref<32x128xf32, #tpu.memory_space<vmem>>, vector<32x128xf32>
    %cst = arith.constant dense<0.000000e+00> : vector<8x128xf32>
    %2 = tpu.matmul %0, %1, %cst {dimension_numbers = #tpu.dot_dimension_numbers<[1], [0], [0], [1], [0, 0, 1, 1], [], []>} : vector<8x32xf32>, vector<32x128xf32>, vector<8x128xf32> -> vector<8x128xf32>
    %c0_3 = arith.constant 0 : index
    %c0_4 = arith.constant 0 : index
    %3 = vector.load %arg4[%c0_3, %c0_4] : memref<1x128xf32, #tpu.memory_space<vmem>>, vector<1x128xf32>
    %4 = vector.broadcast %3 : vector<1x128xf32> to vector<8x128xf32>
    %5 = arith.addf %2, %4 : vector<8x128xf32>
    %c0_5 = arith.constant 0 : index
    %c0_6 = arith.constant 0 : index
    %6 = vector.load %arg2[%c0_5, %c0_6] : memref<16x8xf32, #tpu.memory_space<vmem>>, vector<16x8xf32>
    %c0_7 = arith.constant 0 : index
    %c0_8 = arith.constant 0 : index
    %7 = vector.load %arg5[%c0_7, %c0_8] : memref<8x256xf32, #tpu.memory_space<vmem>>, vector<8x256xf32>
    %cst_9 = arith.constant dense<0.000000e+00> : vector<16x256xf32>
    %8 = tpu.matmul %6, %7, %cst_9 {dimension_numbers = #tpu.dot_dimension_numbers<[1], [0], [0], [1], [0, 0, 1, 1], [], []>} : vector<16x8xf32>, vector<8x256xf32>, vector<16x256xf32> -> vector<16x256xf32>
    %c0_10 = arith.constant 0 : index
    %c0_11 = arith.constant 0 : index
    %9 = vector.load %arg6[%c0_10, %c0_11] : memref<1x256xf32, #tpu.memory_space<vmem>>, vector<1x256xf32>
    %10 = vector.broadcast %9 : vector<1x256xf32> to vector<16x256xf32>
    %11 = arith.addf %8, %10 : vector<16x256xf32>
    %12 = vector.extract_strided_slice %11 {offsets = [0, 0], sizes = [16, 128], strides = [1, 1]} : vector<16x256xf32> to vector<16x128xf32>
    %13 = vector.extract_strided_slice %11 {offsets = [0, 128], sizes = [16, 128], strides = [1, 1]} : vector<16x256xf32> to vector<16x128xf32>
    %cst_12 = arith.constant dense<0.000000e+00> : vector<8x16xf32>
    %14 = tpu.matmul %5, %12, %cst_12 {dimension_numbers = #tpu.dot_dimension_numbers<[1], [1], [0], [0], [0, 0, 1, 0], [], []>} : vector<8x128xf32>, vector<16x128xf32>, vector<8x16xf32> -> vector<8x16xf32>
    %cst_13 = arith.constant dense<0xFF800000> : vector<8xf32>
    %15 = vector.multi_reduction <maximumf>, %14, %cst_13 [1] : vector<8x16xf32> to vector<8xf32>
    %16 = vector.shape_cast %15 : vector<8xf32> to vector<8x1xf32>
    %17 = vector.broadcast %16 : vector<8x1xf32> to vector<8x16xf32>
    %18 = arith.subf %14, %17 : vector<8x16xf32>
    %19 = math.exp %18 : vector<8x16xf32>
    %cst_14 = arith.constant dense<0.000000e+00> : vector<8xf32>
    %20 = vector.multi_reduction <add>, %19, %cst_14 [1] : vector<8x16xf32> to vector<8xf32>
    %21 = vector.shape_cast %20 : vector<8xf32> to vector<8x1xf32>
    %22 = tpu.reciprocal %21 : vector<8x1xf32> -> vector<8x1xf32>
    %23 = vector.broadcast %22 : vector<8x1xf32> to vector<8x16xf32>
    %24 = arith.mulf %19, %23 : vector<8x16xf32>
    %cst_15 = arith.constant dense<0.000000e+00> : vector<8x128xf32>
    %25 = tpu.matmul %24, %13, %cst_15 {dimension_numbers = #tpu.dot_dimension_numbers<[1], [0], [0], [1], [0, 0, 1, 1], [], []>} : vector<8x16xf32>, vector<16x128xf32>, vector<8x128xf32> -> vector<8x128xf32>
    %26 = math.tanh %25 : vector<8x128xf32>
    %c0_16 = arith.constant 0 : index
    %c0_17 = arith.constant 0 : index
    %27 = vector.load %arg7[%c0_16, %c0_17] : memref<8x128xf32, #tpu.memory_space<vmem>>, vector<8x128xf32>
    tpu.vector_store %arg7[%c0_16, %c0_17], %26 {strides = array<i32>} : memref<8x128xf32, #tpu.memory_space<vmem>>, vector<8x128xf32>,
    return
  }
  func.func @transform_0(%arg0: i32) -> (i32, i32) {
    %c0_i32 = arith.constant 0 : i32
    %c0_i32_0 = arith.constant 0 : i32
    return %arg0, %c0_i32 : i32, i32
  }
  func.func @transform_1(%arg0: i32) -> (i32, i32) {
    %c0_i32 = arith.constant 0 : i32
    %c0_i32_0 = arith.constant 0 : i32
    %c0_i32_1 = arith.constant 0 : i32
    return %c0_i32, %c0_i32_0 : i32, i32
  }
  func.func @transform_2(%arg0: i32) -> (i32, i32) {
    %c0_i32 = arith.constant 0 : i32
    %c0_i32_0 = arith.constant 0 : i32
    %c0_i32_1 = arith.constant 0 : i32
    return %c0_i32, %c0_i32_0 : i32, i32
  }
  func.func @transform_3(%arg0: i32) -> (i32, i32) {
    %c0_i32 = arith.constant 0 : i32
    %c0_i32_0 = arith.constant 0 : i32
    %c0_i32_1 = arith.constant 0 : i32
    return %c0_i32, %c0_i32_0 : i32, i32
  }
  func.func @transform_4(%arg0: i32) -> (i32, i32) {
    %c0_i32 = arith.constant 0 : i32
    %c0_i32_0 = arith.constant 0 : i32
    %c0_i32_1 = arith.constant 0 : i32
    return %c0_i32, %c0_i32_0 : i32, i32
  }
  func.func @transform_5(%arg0: i32) -> (i32, i32) {
    %c0_i32 = arith.constant 0 : i32
    %c0_i32_0 = arith.constant 0 : i32
    %c0_i32_1 = arith.constant 0 : i32
    return %c0_i32, %c0_i32_0 : i32, i32
  }
  func.func @transform_6(%arg0: i32) -> (i32, i32) {
    %c0_i32 = arith.constant 0 : i32
    %c0_i32_0 = arith.constant 0 : i32
    return %arg0, %c0_i32 : i32, i32
  }
}

</mosaic_0001>

<llo_original>
// kernel: rolling_attention3_forward.1
$region0: #{rolling_attention3_forward.1}
  #allocation0 [shape = 'u32[]', space=smem, size = 0x4, offset = 0x4, fixed_abs, tag = 'smem constant byte address 0x4 - core index']
  #allocation1 [shape = 'u32[144,128]{1,0:T(1,128)}', space=vmem, size = 0x12000, scoped, tag = 'internal scratch']
  %s0 = inlined_call_operand.hbm [shape: f32[32,32], index: 0, kind: input, shape index: {}]
  %s1 = inlined_call_operand.vmem [shape: f32[16,8], index: 1, kind: input, shape index: {}]
  %s2 = inlined_call_operand.hbm [shape: f32[32,128], index: 2, kind: input, shape index: {}]
  %s3 = inlined_call_operand.vmem [shape: f32[1,128], index: 3, kind: input, shape index: {}]
  %s4 = inlined_call_operand.vmem [shape: f32[8,256], index: 4, kind: input, shape index: {}]
  %s5 = inlined_call_operand.vmem [shape: f32[1,256], index: 5, kind: input, shape index: {}]
  %s6 = inlined_call_operand.hbm [shape: f32[32,128], index: 6, kind: output, shape index: {}]
  %s7 = sld [smem:[#allocation0]]
  $region65: #{rolling_attention3_forward.1} parent=0
    _
  %s9 = ssub.s32 1, %s7
  %s10 = scalar_select 0, %s9, %s7
  $region1: #{rolling_attention3_forward.1} parent=0
    #allocation2 [shape = 'u8[8192]{0}', space=vmem, size = 0x2000, scoped, tag = 'input window, operand 0']
    #allocation3 [shape = 's32[2]{0}', space=sflag, size = 0x8, scoped, tag = 'scoped memory for rolling_attention3_forward.1']
    #allocation4 [shape = 's32[2]{0}', space=sflag, size = 0x8, scoped, tag = 'scoped memory for rolling_attention3_forward.1']
    #allocation5 [shape = 'u8[16384]{0}', space=vmem, size = 0x4000, scoped, tag = 'input window, operand 2, single buffered']
    #allocation6 [shape = 's32[1]{0}', space=sflag, size = 0x4, scoped, tag = 'scoped memory for rolling_attention3_forward.1']
    #allocation7 [shape = 'u8[8192]{0}', space=vmem, size = 0x2000, scoped, tag = 'output window, operand 0']
    %11 = vsyncpa [#allocation3], 0
    %s12 = scalar_lea.sflag [#allocation3], 1
    %13 = vsyncpa %s12, 0
    %14 = vsyncpa [#allocation6], 0
    %15 = vsyncpa [#allocation4], 0
    %s16 = scalar_lea.sflag [#allocation4], 1
    %17 = vsyncpa %s16, 0
    loop: start=0, step=1, limit=6
    $region2: #{rolling_attention3_forward.1} parent=1 // loop_pre_header
      _
    $region3: #{rolling_attention3_forward.1} parent=1 // loop_header
      %s19 = sphi 0, %s23
      %p20 = scmp.ge.s32.totalorder %s19, 6
      %s29 = sphi 0, %s31
      %s32 = sphi 0, %s29
      %s33 = sphi 0, %s32
      %s49 = sphi 0, %s33
      %s53 = sphi 0, %s53
      %s55 = sphi 0, %s53
      %s56 = sphi 0, %s55
      %s70 = sphi 0, %s56
      %s74 = sphi 0, %s74
      %s76 = sphi 0, %s74
      %s77 = sphi 0, %s76
      %s91 = sphi 0, %s77
      %s95 = sphi 0, %s95
      %s97 = sphi 0, %s95
      %s98 = sphi 0, %s97
      %s112 = sphi 0, %s98
      %s116 = sphi 0, %s116
      %s118 = sphi 0, %s116
      %s119 = sphi 0, %s118
      %s133 = sphi 0, %s119
      %s137 = sphi 0, %s137
      %s139 = sphi 0, %s137
      %s140 = sphi 0, %s139
      %s154 = sphi 0, %s140
      %s160 = sphi 0, %s162
      %s163 = sphi 0, %s160
      %s164 = sphi 0, %s163
      %s180 = sphi 0, %s164
    $region4: #{rolling_attention3_forward.1} parent=1 // loop_header_branch
      %22 = sbr.rel (%p20) target = $region8
    $region5: #{rolling_attention3_forward.1} parent=1 // loop_body
      %s24 = ssub.s32 %s19, 1
      %s25 = ssub.s32 %s19, 2
      %s26 = sadd.s32 %s19, 1
      %s27 = ssub.s32 %s19, %s26
      %p28 = scmp.eq.s32.totalorder %s27, 0
      %s30 = sadd.s32 %s29, 1
      %s31 = scalar_select %p28, %s29, %s30
      %p34 = pneg %p28
      %p35 = scmp.eq.s32.totalorder %s19, 3
      %p36 = por %p34, %p35
      %p37 = scmp.ne.s32.totalorder %s29, %s32
      %p38 = scmp.eq.s32.totalorder %s19, 0
      %p39 = por %p37, %p38
      %p40 = scmp.ne.s32.totalorder %s29, %s32
      %p41 = scmp.eq.s32.totalorder %s24, 3
      %p42 = por %p40, %p41
      %p43 = scmp.ne.s32.totalorder %s32, %s33
      %p44 = scmp.eq.s32.totalorder %s24, 0
      %p45 = por %p43, %p44
      %p46 = scmp.ne.s32.totalorder %s32, %s33
      %p47 = scmp.eq.s32.totalorder %s25, 3
      %p48 = por %p46, %p47
      %p50 = scmp.ne.s32.totalorder %s33, %s49
      %p51 = scmp.eq.s32.totalorder %s25, 0
      %p52 = por %p50, %p51
      %s54 = sadd.s32 %s53, 1
      %p57 = scmp.eq.s32.totalorder %s19, 3
      %p58 = scmp.ne.s32.totalorder %s53, %s55
      %p59 = scmp.eq.s32.totalorder %s19, 0
      %p60 = por %p58, %p59
      %p61 = scmp.ne.s32.totalorder %s53, %s55
      %p62 = scmp.eq.s32.totalorder %s24, 3
      %p63 = por %p61, %p62
      %p64 = scmp.ne.s32.totalorder %s55, %s56
      %p65 = scmp.eq.s32.totalorder %s24, 0
      %p66 = por %p64, %p65
      %p67 = scmp.ne.s32.totalorder %s55, %s56
      %p68 = scmp.eq.s32.totalorder %s25, 3
      %p69 = por %p67, %p68
      %p71 = scmp.ne.s32.totalorder %s56, %s70
      %p72 = scmp.eq.s32.totalorder %s25, 0
      %p73 = por %p71, %p72
      %s75 = sadd.s32 %s74, 1
      %p78 = scmp.eq.s32.totalorder %s19, 3
      %p79 = scmp.ne.s32.totalorder %s74, %s76
      %p80 = scmp.eq.s32.totalorder %s19, 0
      %p81 = por %p79, %p80
      %p82 = scmp.ne.s32.totalorder %s74, %s76
      %p83 = scmp.eq.s32.totalorder %s24, 3
      %p84 = por %p82, %p83
      %p85 = scmp.ne.s32.totalorder %s76, %s77
      %p86 = scmp.eq.s32.totalorder %s24, 0
      %p87 = por %p85, %p86
      %p88 = scmp.ne.s32.totalorder %s76, %s77
      %p89 = scmp.eq.s32.totalorder %s25, 3
      %p90 = por %p88, %p89
      %p92 = scmp.ne.s32.totalorder %s77, %s91
      %p93 = scmp.eq.s32.totalorder %s25, 0
      %p94 = por %p92, %p93
      %s96 = sadd.s32 %s95, 1
      %p99 = scmp.eq.s32.totalorder %s19, 3
      %p100 = scmp.ne.s32.totalorder %s95, %s97
      %p101 = scmp.eq.s32.totalorder %s19, 0
      %p102 = por %p100, %p101
      %p103 = scmp.ne.s32.totalorder %s95, %s97
      %p104 = scmp.eq.s32.totalorder %s24, 3
      %p105 = por %p103, %p104
      %p106 = scmp.ne.s32.totalorder %s97, %s98
      %p107 = scmp.eq.s32.totalorder %s24, 0
      %p108 = por %p106, %p107
      %p109 = scmp.ne.s32.totalorder %s97, %s98
      %p110 = scmp.eq.s32.totalorder %s25, 3
      %p111 = por %p109, %p110
      %p113 = scmp.ne.s32.totalorder %s98, %s112
      %p114 = scmp.eq.s32.totalorder %s25, 0
      %p115 = por %p113, %p114
      %s117 = sadd.s32 %s116, 1
      %p120 = scmp.eq.s32.totalorder %s19, 3
      %p121 = scmp.ne.s32.totalorder %s116, %s118
      %p122 = scmp.eq.s32.totalorder %s19, 0
      %p123 = por %p121, %p122
      %p124 = scmp.ne.s32.totalorder %s116, %s118
      %p125 = scmp.eq.s32.totalorder %s24, 3
      %p126 = por %p124, %p125
      %p127 = scmp.ne.s32.totalorder %s118, %s119
      %p128 = scmp.eq.s32.totalorder %s24, 0
      %p129 = por %p127, %p128
      %p130 = scmp.ne.s32.totalorder %s118, %s119
      %p131 = scmp.eq.s32.totalorder %s25, 3
      %p132 = por %p130, %p131
      %p134 = scmp.ne.s32.totalorder %s119, %s133
      %p135 = scmp.eq.s32.totalorder %s25, 0
      %p136 = por %p134, %p135
      %s138 = sadd.s32 %s137, 1
      %p141 = scmp.eq.s32.totalorder %s19, 3
      %p142 = scmp.ne.s32.totalorder %s137, %s139
      %p143 = scmp.eq.s32.totalorder %s19, 0
      %p144 = por %p142, %p143
      %p145 = scmp.ne.s32.totalorder %s137, %s139
      %p146 = scmp.eq.s32.totalorder %s24, 3
      %p147 = por %p145, %p146
      %p148 = scmp.ne.s32.totalorder %s139, %s140
      %p149 = scmp.eq.s32.totalorder %s24, 0
      %p150 = por %p148, %p149
      %p151 = scmp.ne.s32.totalorder %s139, %s140
      %p152 = scmp.eq.s32.totalorder %s25, 3
      %p153 = por %p151, %p152
      %p155 = scmp.ne.s32.totalorder %s140, %s154
      %p156 = scmp.eq.s32.totalorder %s25, 0
      %p157 = por %p155, %p156
      %s158 = ssub.s32 %s19, %s26
      %p159 = scmp.eq.s32.totalorder %s158, 0
      %s161 = sadd.s32 %s160, 1
      %s162 = scalar_select %p159, %s160, %s161
      %p165 = pneg %p159
      %p166 = scmp.eq.s32.totalorder %s19, 3
      %p167 = por %p165, %p166
      %p168 = scmp.ne.s32.totalorder %s160, %s163
      %p169 = scmp.eq.s32.totalorder %s19, 0
      %p170 = por %p168, %p169
      %p171 = scmp.ne.s32.totalorder %s160, %s163
      %p172 = scmp.eq.s32.totalorder %s24, 3
      %p173 = por %p171, %p172
      %p174 = scmp.ne.s32.totalorder %s163, %s164
      %p175 = scmp.eq.s32.totalorder %s24, 0
      %p176 = por %p174, %p175
      %p177 = scmp.ne.s32.totalorder %s163, %s164
      %p178 = scmp.eq.s32.totalorder %s25, 3
      %p179 = por %p177, %p178
      %p181 = scmp.ne.s32.totalorder %s164, %s180
      %p182 = scmp.eq.s32.totalorder %s25, 0
      %p183 = por %p181, %p182
      %p184 = scmp.le.s32.totalorder 1, %s19
      %p185 = scmp.lt.s32.totalorder %s19, 5
      %p186 = pnand %p184, %p185
      %p187 = pneg %p186
      // Predicated region
      $region9: #{rolling_attention3_forward.1} parent=5 // pred_check
        _
      $region10: #{rolling_attention3_forward.1} parent=5 // pred_check_branch
        %189 = sbr.rel (%p186) target = $region12
      $region11: #{rolling_attention3_forward.1} parent=5 // pred_region
        %s190 = ssub.s32 %s19, 1
        // Predicated region
        $region13: #{rolling_attention3_forward.1} parent=11 // pred_check
          %p191 = pneg %p66
        $region14: #{rolling_attention3_forward.1} parent=11 // pred_check_branch
          %193 = sbr.rel (%p191) target = $region16
        $region15: #{rolling_attention3_forward.1} parent=11 // pred_region
          _
        $region16: #{rolling_attention3_forward.1} parent=11 // pred_fallthru
          _
        // Predicated region
        $region17: #{rolling_attention3_forward.1} parent=11 // pred_check
          %p194 = pneg %p87
        $region18: #{rolling_attention3_forward.1} parent=11 // pred_check_branch
          %196 = sbr.rel (%p194) target = $region20
        $region19: #{rolling_attention3_forward.1} parent=11 // pred_region
          %s198 = ssub.s32 512, 512
          %199 = vsyncadd [#allocation6], %s198
          %s200 = sshll.u32 [#allocation5], 4
          %s201 = int_to_ptr.vmem [resolvable:$true] %s200
          %206 = dma.hbm_to_vmem [thread:$0]  %s2, 512, %s201, [#allocation6], 128, 128, 8
        $region20: #{rolling_attention3_forward.1} parent=11 // pred_fallthru
          _
        // Predicated region
        $region21: #{rolling_attention3_forward.1} parent=11 // pred_check
          %p207 = pneg %p108
        $region22: #{rolling_attention3_forward.1} parent=11 // pred_check_branch
          %209 = sbr.rel (%p207) target = $region24
        $region23: #{rolling_attention3_forward.1} parent=11 // pred_region
          _
        $region24: #{rolling_attention3_forward.1} parent=11 // pred_fallthru
          _
        // Predicated region
        $region25: #{rolling_attention3_forward.1} parent=11 // pred_check
          %p210 = pneg %p129
        $region26: #{rolling_attention3_forward.1} parent=11 // pred_check_branch
          %212 = sbr.rel (%p210) target = $region28
        $region27: #{rolling_attention3_forward.1} parent=11 // pred_region
          _
        $region28: #{rolling_attention3_forward.1} parent=11 // pred_fallthru
          _
        // Predicated region
        $region29: #{rolling_attention3_forward.1} parent=11 // pred_check
          %p213 = pneg %p150
        $region30: #{rolling_attention3_forward.1} parent=11 // pred_check_branch
          %215 = sbr.rel (%p213) target = $region32
        $region31: #{rolling_attention3_forward.1} parent=11 // pred_region
          _
        $region32: #{rolling_attention3_forward.1} parent=11 // pred_fallthru
          _
      $region12: #{rolling_attention3_forward.1} parent=5 // pred_fallthru
        _
      %p216 = scmp.lt.s32.totalorder %s19, 4
      // Predicated region
      $region33: #{rolling_attention3_forward.1} parent=5 // pred_check
        %p217 = pneg %p216
      $region34: #{rolling_attention3_forward.1} parent=5 // pred_check_branch
        %219 = sbr.rel (%p217) target = $region36
      $region35: #{rolling_attention3_forward.1} parent=5 // pred_region
        // Predicated region
        $region37: #{rolling_attention3_forward.1} parent=35 // pred_check
          %p220 = pneg %p39
        $region38: #{rolling_attention3_forward.1} parent=35 // pred_check_branch
          %222 = sbr.rel (%p220) target = $region40
        $region39: #{rolling_attention3_forward.1} parent=35 // pred_region
          %s223 = sand.u32 %s29, 1
          %s224 = scalar_lea.sflag [#allocation3], %s223
          %s225 = sand.u32 %s29, 1
          %s226 = smul.addr %s225, 8
          %s227 = scalar_lea.vmem [#allocation2], %s226
          %s229 = ssub.s32 128, 128
          %230 = vsyncadd %s224, %s229
          %s231 = smul.addr %s19, 128
          %s232 = scalar_lea.hbm %s0, %s231
          %s234 = sshll.u32 %s227, 4
          %s235 = int_to_ptr.vmem [resolvable:$true] %s234
          %237 = dma.hbm_to_vmem [thread:$0]  %s232, 128, %s235, %s224
        $region40: #{rolling_attention3_forward.1} parent=35 // pred_fallthru
          _
      $region36: #{rolling_attention3_forward.1} parent=5 // pred_fallthru
        _
      %p238 = scmp.le.s32.totalorder 1, %s19
      %p239 = scmp.lt.s32.totalorder %s19, 5
      %p240 = pnand %p238, %p239
      %p241 = pneg %p240
      // Predicated region
      $region41: #{rolling_attention3_forward.1} parent=5 // pred_check
        _
      $region42: #{rolling_attention3_forward.1} parent=5 // pred_check_branch
        %243 = sbr.rel (%p240) target = $region44
      $region43: #{rolling_attention3_forward.1} parent=5 // pred_region
        %s244 = ssub.s32 %s19, 1
        %s245 = sand.u32 %s32, 1
        %s246 = scalar_lea.sflag [#allocation3], %s245
        %s247 = sand.u32 %s32, 1
        %s248 = smul.addr %s247, 8
        %s249 = scalar_lea.vmem [#allocation2], %s248
        // Predicated region
        $region45: #{rolling_attention3_forward.1} parent=43 // pred_check
          %p250 = pneg %p45
        $region46: #{rolling_attention3_forward.1} parent=43 // pred_check_branch
          %252 = sbr.rel (%p250) target = $region48
        $region47: #{rolling_attention3_forward.1} parent=43 // pred_region
          %253 = dma.done %s246, 128
        $region48: #{rolling_attention3_forward.1} parent=43 // pred_fallthru
          _
        // Predicated region
        $region49: #{rolling_attention3_forward.1} parent=43 // pred_check
          %p254 = pneg %p87
        $region50: #{rolling_attention3_forward.1} parent=43 // pred_check_branch
          %256 = sbr.rel (%p254) target = $region52
        $region51: #{rolling_attention3_forward.1} parent=43 // pred_region
          %257 = dma.done [#allocation6], 512
        $region52: #{rolling_attention3_forward.1} parent=43 // pred_fallthru
          _
        %s258 = sand.u32 %s32, 1
        %s259 = scalar_lea.sflag [#allocation3], %s258
        %s260 = sand.u32 %s32, 1
        %s261 = smul.addr %s260, 8
        %s262 = scalar_lea.vmem [#allocation2], %s261
        %p263 = pneg %p45
        %p264 = pneg %p42
        %p265 = pneg %p66
        %p266 = pneg %p63
        %p267 = pneg %p87
        %p268 = pneg %p84
        %p269 = pneg %p108
        %p270 = pneg %p105
        %p271 = pneg %p129
        %p272 = pneg %p126
        %p273 = pneg %p150
        %p274 = pneg %p147
        %p275 = pneg %p176
        %p276 = pneg %p173
        %s277 = sand.u32 %s163, 1
        %s278 = scalar_lea.sflag [#allocation4], %s277
        %s279 = sand.u32 %s163, 1
        %s280 = smul.addr %s279, 8
        %s281 = scalar_lea.vmem [#allocation7], %s280
        %v282 = vld [vmem:[%s249] sm:$0xff]
        %v283 = vld [vmem:[#allocation5] sm:$0xff]
        %v284 = vld [vmem:[#allocation5 + $0x8] sm:$0xff]
        %v285 = vld [vmem:[#allocation5 + $0x10] sm:$0xff]
        %v286 = vld [vmem:[#allocation5 + $0x18] sm:$0xff]
        %v287 = vld [vmem:[%s3] sm:$0x1]
        %v289 = vlaneseq
        %v290 = vshrl.u32 %v289, 7
        %v291 = vsub.s32 0, %v290
        %v292 = vrot.slane %v287, %v291
        %vm294 = vcmask 261120
        %v296 = vsel %vm294, %v282, 0
        %298 = vmatprep.subr.mxu0 0.0
        %299 = vmatpush1.msra.mxu0 %v283
        %300 = vmatprep.subr.mxu0 0.0
        %301 = vmatpush1.msra.mxu0 %v284
        %302 = vmatprep.subr.mxu0 0.0
        %303 = vmatpush1.msra.mxu0 %v285
        %304 = vmatprep.subr.mxu0 0.0
        %305 = vmatpush1.msra.mxu0 %v286
        %306 = vmatprep.subr.mxu0 0.0
        %307 = vmatpush1.msra.mxu0 0.0
        %308 = vmatprep.subr.mxu0 0.0
        %309 = vmatpush1.msra.mxu0 0.0
        %310 = vmatprep.subr.mxu0 0.0
        %311 = vmatpush1.msra.mxu0 0.0
        %312 = vmatprep.subr.mxu0 0.0
        %313 = vmatpush1.msra.mxu0 0.0
        %314 = vmatprep.subr.mxu0 0.0
        %315 = vmatpush1.msra.mxu0 0.0
        %316 = vmatprep.subr.mxu0 0.0
        %317 = vmatpush1.msra.mxu0 0.0
        %318 = vmatprep.subr.mxu0 0.0
        %319 = vmatpush1.msra.mxu0 0.0
        %320 = vmatprep.subr.mxu0 0.0
        %321 = vmatpush1.msra.mxu0 0.0
        %322 = vmatprep.subr.mxu0 0.0
        %323 = vmatpush1.msra.mxu0 0.0
        %324 = vmatprep.subr.mxu0 0.0
        %325 = vmatpush1.msra.mxu0 0.0
        %326 = vmatprep.subr.mxu0 0.0
        %327 = vmatpush1.msra.mxu0 0.0
        %328 = vmatprep.subr.mxu0 0.0
        %329 = vmatpush1.msra.mxu0 0.0
        %330 = vmatprep.subr.mxu0 0.0
        %331 = vmatpush1.msra.mxu0 0.0
        %332 = vmatprep.subr.mxu0 0.0
        %333 = vmatpush1.msra.mxu0 0.0
        %334 = vmatprep.subr.mxu0 0.0
        %335 = vmatpush1.msra.mxu0 0.0
        %336 = vmatprep.subr.mxu0 0.0
        %337 = vmatpush1.msra.mxu0 0.0
        %338 = vmatprep.subr.mxu0 0.0
        %339 = vmatpush1.msra.mxu0 0.0
        %340 = vmatprep.subr.mxu0 0.0
        %341 = vmatpush1.msra.mxu0 0.0
        %342 = vmatprep.subr.mxu0 0.0
        %343 = vmatpush1.msra.mxu0 0.0
        %344 = vmatprep.subr.mxu0 0.0
        %345 = vmatpush1.msra.mxu0 0.0
        %346 = vmatprep.subr.mxu0 0.0
        %347 = vmatpush1.msra.mxu0 0.0
        %348 = vmatprep.subr.mxu0 0.0
        %349 = vmatpush1.msra.mxu0 0.0
        %350 = vmatprep.subr.mxu0 0.0
        %351 = vmatpush1.msra.mxu0 0.0
        %352 = vmatprep.subr.mxu0 0.0
        %353 = vmatpush1.msra.mxu0 0.0
        %354 = vmatprep.subr.mxu0 0.0
        %355 = vmatpush1.msra.mxu0 0.0
        %356 = vmatprep.subr.mxu0 0.0
        %357 = vmatpush1.msra.mxu0 0.0
        %358 = vmatprep.subr.mxu0 0.0
        %359 = vmatpush1.msra.mxu0 0.0
        %360 = vmatprep.subr.mxu0 0.0
        %361 = vmatpush1.msra.mxu0 0.0
        %362 = vmatprep.mubr.f32.mxu0 0.0
        %363 = vmatmul.mubr.f32.gmra.mrb[0].mxu0 %v296
        %v364 = vpop.f32.mrb[0].mxu0
        %v365 = vadd.f32 %v292, %v364
        %v366 = vpop.f32.mrb[0].mxu0
        %367 = vdwg.mxu0
        %v368 = vld [vmem:[%s1] sm:$0xff]
        %v369 = vld [vmem:[%s1 + $0x8] sm:$0xff]
        %v370 = vld [vmem:[%s4] sm:$0xff]
        %v371 = vld [vmem:[%s4 + $0x8] sm:$0xff]
        %v372 = vld [vmem:[%s5] sm:$0x3]
        %v374 = vlaneseq
        %v375 = vshrl.u32 %v374, 7
        %v376 = vsub.s32 0, %v375
        %v377 = vrot.slane %v372, %v376
        %v378 = vlaneseq
        %v379 = vshrl.u32 %v378, 7
        %v380 = vsub.s32 1, %v379
        %v381 = vrot.slane %v372, %v380
        %vm384 = vcmask 64512
        %v386 = vsel %vm384, %v368, 0
        %v389 = vsel %vm384, %v369, 0
        %391 = vmatprep.subr.mxu0 %v371
        %392 = vmatpush1.msra.mxu0 %v370
        %393 = vmatprep.subr.mxu0 0.0
        %394 = vmatpush1.msra.mxu0 0.0
        %395 = vmatprep.subr.mxu0 0.0
        %396 = vmatpush1.msra.mxu0 0.0
        %397 = vmatprep.subr.mxu0 0.0
        %398 = vmatpush1.msra.mxu0 0.0
        %399 = vmatprep.subr.mxu0 0.0
        %400 = vmatpush1.msra.mxu0 0.0
        %401 = vmatprep.subr.mxu0 0.0
        %402 = vmatpush1.msra.mxu0 0.0
        %403 = vmatprep.subr.mxu0 0.0
        %404 = vmatpush1.msra.mxu0 0.0
        %405 = vmatprep.subr.mxu0 0.0
        %406 = vmatpush1.msra.mxu0 0.0
        %407 = vmatprep.subr.mxu0 0.0
        %408 = vmatpush1.msra.mxu0 0.0
        %409 = vmatprep.subr.mxu0 0.0
        %410 = vmatpush1.msra.mxu0 0.0
        %411 = vmatprep.subr.mxu0 0.0
        %412 = vmatpush1.msra.mxu0 0.0
        %413 = vmatprep.subr.mxu0 0.0
        %414 = vmatpush1.msra.mxu0 0.0
        %415 = vmatprep.subr.mxu0 0.0
        %416 = vmatpush1.msra.mxu0 0.0
        %417 = vmatprep.subr.mxu0 0.0
        %418 = vmatpush1.msra.mxu0 0.0
        %419 = vmatprep.subr.mxu0 0.0
        %420 = vmatpush1.msra.mxu0 0.0
        %421 = vmatprep.subr.mxu0 0.0
        %422 = vmatpush1.msra.mxu0 0.0
        %423 = vmatprep.subr.mxu0 0.0
        %424 = vmatpush1.msra.mxu0 0.0
        %425 = vmatprep.subr.mxu0 0.0
        %426 = vmatpush1.msra.mxu0 0.0
        %427 = vmatprep.subr.mxu0 0.0
        %428 = vmatpush1.msra.mxu0 0.0
        %429 = vmatprep.subr.mxu0 0.0
        %430 = vmatpush1.msra.mxu0 0.0
        %431 = vmatprep.subr.mxu0 0.0
        %432 = vmatpush1.msra.mxu0 0.0
        %433 = vmatprep.subr.mxu0 0.0
        %434 = vmatpush1.msra.mxu0 0.0
        %435 = vmatprep.subr.mxu0 0.0
        %436 = vmatpush1.msra.mxu0 0.0
        %437 = vmatprep.subr.mxu0 0.0
        %438 = vmatpush1.msra.mxu0 0.0
        %439 = vmatprep.subr.mxu0 0.0
        %440 = vmatpush1.msra.mxu0 0.0
        %441 = vmatprep.subr.mxu0 0.0
        %442 = vmatpush1.msra.mxu0 0.0
        %443 = vmatprep.subr.mxu0 0.0
        %444 = vmatpush1.msra.mxu0 0.0
        %445 = vmatprep.subr.mxu0 0.0
        %446 = vmatpush1.msra.mxu0 0.0
        %447 = vmatprep.subr.mxu0 0.0
        %448 = vmatpush1.msra.mxu0 0.0
        %449 = vmatprep.subr.mxu0 0.0
        %450 = vmatpush1.msra.mxu0 0.0
        %451 = vmatprep.subr.mxu0 0.0
        %452 = vmatpush1.msra.mxu0 0.0
        %453 = vmatprep.subr.mxu0 0.0
        %454 = vmatpush1.msra.mxu0 0.0
        %455 = vmatprep.mubr.f32.mxu0 0.0
        %456 = vmatmul.mubr.f32.gmra.mrb[0].mxu0 %v386
        %v457 = vpop.f32.mrb[0].mxu0
        %v458 = vadd.f32 %v377, %v457
        %v459 = vpop.f32.mrb[0].mxu0
        %v460 = vadd.f32 %v381, %v459
        %461 = vmatprep.mubr.f32.mxu0 0.0
        %462 = vmatmul.mubr.f32.gmra.mrb[0].mxu0 %v389
        %v463 = vpop.f32.mrb[0].mxu0
        %v464 = vadd.f32 %v377, %v463
        %v465 = vpop.f32.mrb[0].mxu0
        %v466 = vadd.f32 %v381, %v465
        %467 = vdwg.mxu0
        %468 = vmatprep.subr.mxu0 0.0
        %469 = vmatpush1.xpose.msra.mxu0 %v458
        %470 = vmatprep.subr.mxu0 0.0
        %471 = vmatpush1.xpose.msra.mxu0 %v464
        %472 = vmatprep.subr.mxu0 0.0
        %473 = vmatpush1.xpose.msra.mxu0 0.0
        %474 = vmatprep.subr.mxu0 0.0
        %475 = vmatpush1.xpose.msra.mxu0 0.0
        %476 = vmatprep.subr.mxu0 0.0
        %477 = vmatpush1.xpose.msra.mxu0 0.0
        %478 = vmatprep.subr.mxu0 0.0
        %479 = vmatpush1.xpose.msra.mxu0 0.0
        %480 = vmatprep.subr.mxu0 0.0
        %481 = vmatpush1.xpose.msra.mxu0 0.0
        %482 = vmatprep.subr.mxu0 0.0
        %483 = vmatpush1.xpose.msra.mxu0 0.0
        %484 = vmatprep.subr.mxu0 0.0
        %485 = vmatpush1.xpose.msra.mxu0 0.0
        %486 = vmatprep.subr.mxu0 0.0
        %487 = vmatpush1.xpose.msra.mxu0 0.0
        %488 = vmatprep.subr.mxu0 0.0
        %489 = vmatpush1.xpose.msra.mxu0 0.0
        %490 = vmatprep.subr.mxu0 0.0
        %491 = vmatpush1.xpose.msra.mxu0 0.0
        %492 = vmatprep.subr.mxu0 0.0
        %493 = vmatpush1.xpose.msra.mxu0 0.0
        %494 = vmatprep.subr.mxu0 0.0
        %495 = vmatpush1.xpose.msra.mxu0 0.0
        %496 = vmatprep.subr.mxu0 0.0
        %497 = vmatpush1.xpose.msra.mxu0 0.0
        %498 = vmatprep.subr.mxu0 0.0
        %499 = vmatpush1.xpose.msra.mxu0 0.0
        %500 = vmatprep.subr.mxu0 0.0
        %501 = vmatpush1.xpose.msra.mxu0 0.0
        %502 = vmatprep.subr.mxu0 0.0
        %503 = vmatpush1.xpose.msra.mxu0 0.0
        %504 = vmatprep.subr.mxu0 0.0
        %505 = vmatpush1.xpose.msra.mxu0 0.0
        %506 = vmatprep.subr.mxu0 0.0
        %507 = vmatpush1.xpose.msra.mxu0 0.0
        %508 = vmatprep.subr.mxu0 0.0
        %509 = vmatpush1.xpose.msra.mxu0 0.0
        %510 = vmatprep.subr.mxu0 0.0
        %511 = vmatpush1.xpose.msra.mxu0 0.0
        %512 = vmatprep.subr.mxu0 0.0
        %513 = vmatpush1.xpose.msra.mxu0 0.0
        %514 = vmatprep.subr.mxu0 0.0
        %515 = vmatpush1.xpose.msra.mxu0 0.0
        %516 = vmatprep.subr.mxu0 0.0
        %517 = vmatpush1.xpose.msra.mxu0 0.0
        %518 = vmatprep.subr.mxu0 0.0
        %519 = vmatpush1.xpose.msra.mxu0 0.0
        %520 = vmatprep.subr.mxu0 0.0
        %521 = vmatpush1.xpose.msra.mxu0 0.0
        %522 = vmatprep.subr.mxu0 0.0
        %523 = vmatpush1.xpose.msra.mxu0 0.0
        %524 = vmatprep.subr.mxu0 0.0
        %525 = vmatpush1.xpose.msra.mxu0 0.0
        %526 = vmatprep.subr.mxu0 0.0
        %527 = vmatpush1.xpose.msra.mxu0 0.0
        %528 = vmatprep.subr.mxu0 0.0
        %529 = vmatpush1.xpose.msra.mxu0 0.0
        %530 = vmatprep.subr.mxu0 0.0
        %531 = vmatpush1.xpose.msra.mxu0 0.0
        %532 = vmatprep.mubr.f32.mxu0 0.0
        %533 = vmatmul.mubr.f32.gmra.mrb[0].mxu0 %v365
        %v534 = vpop.f32.mrb[0].mxu0
        %v535 = vadd.f32 0.0, %v534
        %v536 = vpop.f32.mrb[0].mxu0
        %537 = vdwg.mxu0
        %vm538 = vcmask 130048
        %v539 = vsel %vm538, %v535, -inf
        %540 = vmax.xlane.f32.xlu0 %v539
        %v541 = vpop.xlane.xlu0 %540
        %v542 = vsub.f32 %v535, %v541
        %v543 = vmul.f32 %v542, 1.442695
        %v544 = vpow.pop %v543
        %v545 = vsel %vm538, %v544, 0.0
        %546 = vadd.xlane.f32.xlu0 %v545
        %v547 = vpop.xlane.xlu0 %546
        %v548 = vrcp.pop %v547
        %v549 = vmul.f32 %v544, %v548
        %v551 = vsel %vm538, %v549, 0
        %553 = vmatprep.subr.mxu0 0.0
        %554 = vmatpush1.msra.mxu0 %v460
        %555 = vmatprep.subr.mxu0 0.0
        %556 = vmatpush1.msra.mxu0 %v466
        %557 = vmatprep.subr.mxu0 0.0
        %558 = vmatpush1.msra.mxu0 0.0
        %559 = vmatprep.subr.mxu0 0.0
        %560 = vmatpush1.msra.mxu0 0.0
        %561 = vmatprep.subr.mxu0 0.0
        %562 = vmatpush1.msra.mxu0 0.0
        %563 = vmatprep.subr.mxu0 0.0
        %564 = vmatpush1.msra.mxu0 0.0
        %565 = vmatprep.subr.mxu0 0.0
        %566 = vmatpush1.msra.mxu0 0.0
        %567 = vmatprep.subr.mxu0 0.0
        %568 = vmatpush1.msra.mxu0 0.0
        %569 = vmatprep.subr.mxu0 0.0
        %570 = vmatpush1.msra.mxu0 0.0
        %571 = vmatprep.subr.mxu0 0.0
        %572 = vmatpush1.msra.mxu0 0.0
        %573 = vmatprep.subr.mxu0 0.0
        %574 = vmatpush1.msra.mxu0 0.0
        %575 = vmatprep.subr.mxu0 0.0
        %576 = vmatpush1.msra.mxu0 0.0
        %577 = vmatprep.subr.mxu0 0.0
        %578 = vmatpush1.msra.mxu0 0.0
        %579 = vmatprep.subr.mxu0 0.0
        %580 = vmatpush1.msra.mxu0 0.0
        %581 = vmatprep.subr.mxu0 0.0
        %582 = vmatpush1.msra.mxu0 0.0
        %583 = vmatprep.subr.mxu0 0.0
        %584 = vmatpush1.msra.mxu0 0.0
        %585 = vmatprep.subr.mxu0 0.0
        %586 = vmatpush1.msra.mxu0 0.0
        %587 = vmatprep.subr.mxu0 0.0
        %588 = vmatpush1.msra.mxu0 0.0
        %589 = vmatprep.subr.mxu0 0.0
        %590 = vmatpush1.msra.mxu0 0.0
        %591 = vmatprep.subr.mxu0 0.0
        %592 = vmatpush1.msra.mxu0 0.0
        %593 = vmatprep.subr.mxu0 0.0
        %594 = vmatpush1.msra.mxu0 0.0
        %595 = vmatprep.subr.mxu0 0.0
        %596 = vmatpush1.msra.mxu0 0.0
        %597 = vmatprep.subr.mxu0 0.0
        %598 = vmatpush1.msra.mxu0 0.0
        %599 = vmatprep.subr.mxu0 0.0
        %600 = vmatpush1.msra.mxu0 0.0
        %601 = vmatprep.subr.mxu0 0.0
        %602 = vmatpush1.msra.mxu0 0.0
        %603 = vmatprep.subr.mxu0 0.0
        %604 = vmatpush1.msra.mxu0 0.0
        %605 = vmatprep.subr.mxu0 0.0
        %606 = vmatpush1.msra.mxu0 0.0
        %607 = vmatprep.subr.mxu0 0.0
        %608 = vmatpush1.msra.mxu0 0.0
        %609 = vmatprep.subr.mxu0 0.0
        %610 = vmatpush1.msra.mxu0 0.0
        %611 = vmatprep.subr.mxu0 0.0
        %612 = vmatpush1.msra.mxu0 0.0
        %613 = vmatprep.subr.mxu0 0.0
        %614 = vmatpush1.msra.mxu0 0.0
        %615 = vmatprep.subr.mxu0 0.0
        %616 = vmatpush1.msra.mxu0 0.0
        %617 = vmatprep.mubr.f32.mxu0 0.0
        %618 = vmatmul.mubr.f32.gmra.mrb[0].mxu0 %v551
        %v619 = vpop.f32.mrb[0].mxu0
        %v620 = vadd.f32 0.0, %v619
        %v621 = vpop.f32.mrb[0].mxu0
        %622 = vdwg.mxu0
        %v623 = vtanh.pop %v620
        %624 = vst [vmem:[%s281] sm:$0xff] %v623
        %s625 = sand.u32 %s163, 1
        %s626 = scalar_lea.sflag [#allocation4], %s625
        %s627 = sand.u32 %s163, 1
        %s628 = smul.addr %s627, 8
        %s629 = scalar_lea.vmem [#allocation7], %s628
        // Predicated region
        $region53: #{rolling_attention3_forward.1} parent=43 // pred_check
          %p630 = pneg %p173
        $region54: #{rolling_attention3_forward.1} parent=43 // pred_check_branch
          %632 = sbr.rel (%p630) target = $region56
        $region55: #{rolling_attention3_forward.1} parent=43 // pred_region
          %s634 = ssub.s32 128, 128
          %635 = vsyncadd %s626, %s634
          %s636 = smul.addr %s24, 128
          %s637 = scalar_lea.hbm %s6, %s636
          %s639 = sshll.u32 %s629, 4
          %s640 = int_to_ptr.vmem [resolvable:$true] %s639
          %642 = dma.vmem_to_hbm [thread:$0]  %s640, 128, %s637, %s626
        $region56: #{rolling_attention3_forward.1} parent=43 // pred_fallthru
          _
      $region44: #{rolling_attention3_forward.1} parent=5 // pred_fallthru
        _
      %p643 = scmp.le.s32.totalorder 2, %s19
      // Predicated region
      $region57: #{rolling_attention3_forward.1} parent=5 // pred_check
        %p644 = pneg %p643
      $region58: #{rolling_attention3_forward.1} parent=5 // pred_check_branch
        %646 = sbr.rel (%p644) target = $region60
      $region59: #{rolling_attention3_forward.1} parent=5 // pred_region
        %s647 = ssub.s32 %s19, 2
        // Predicated region
        $region61: #{rolling_attention3_forward.1} parent=59 // pred_check
          %p648 = pneg %p179
        $region62: #{rolling_attention3_forward.1} parent=59 // pred_check_branch
          %650 = sbr.rel (%p648) target = $region64
        $region63: #{rolling_attention3_forward.1} parent=59 // pred_region
          %s651 = sand.u32 %s164, 1
          %s652 = scalar_lea.sflag [#allocation4], %s651
          %s653 = sand.u32 %s164, 1
          %s654 = smul.addr %s653, 8
          %s655 = scalar_lea.vmem [#allocation7], %s654
          %656 = dma.done %s652, 128
        $region64: #{rolling_attention3_forward.1} parent=59 // pred_fallthru
          _
      $region60: #{rolling_attention3_forward.1} parent=5 // pred_fallthru
        _
    $region6: #{rolling_attention3_forward.1} parent=1 // loop_footer
      %s23 = sadd.s32 1, %s19
    $region7: #{rolling_attention3_forward.1} parent=1 // loop_footer_branch
      %18 = sbr.rel target = $region3
    $region8: #{rolling_attention3_forward.1} parent=1 // loop_exit
      _
    %657 = vsyncpa [#allocation3], 1
    %s658 = scalar_lea.sflag [#allocation3], 1
    %659 = vsyncpa %s658, 1
    %660 = vsyncpa [#allocation6], 1
    %661 = vsyncpa [#allocation4], 1
    %s662 = scalar_lea.sflag [#allocation4], 1
    %663 = vsyncpa %s662, 1

</llo_original>
